<compile_context>
chip_gen: v7x
topology: tpu7x:2x2x1
jax: 0.10.0
libtpu: 0.0.40
codegen_flags: <defaults>
</compile_context>

<pallas_src>
import math

import jax
import jax.numpy as jnp
from jax.experimental import pallas as pl
from jax.experimental.pallas import tpu as pltpu

STYLE_DIM = 23
N_MLP = 3
LR_MLP = 0.01
EQL_SCALE = 1.0 / math.sqrt(STYLE_DIM) * LR_MLP  # EqualLinear.scale
LRELU_SLOPE = 0.01                               # F.leaky_relu default
LANE = 128


def _round_up(n, m):
    return (n + m - 1) // m * m


def fc_kernel(x_ref, w_ref, o_ref):
    # x_ref: (TB, 128) batch tile (feature columns >= STYLE_DIM are zero padding)
    # w_ref: (N_MLP, 128, 128) pre-scaled, pre-transposed, zero-padded weights (VMEM-resident)
    x = x_ref[...].astype(jnp.float32)

    # PixelNorm: x * rsqrt(mean(x^2, dim=1) + 1e-8).
    # Padding columns are zero, so the sum is exact; divide by the true feature count.
    ms = jnp.sum(x * x, axis=1, keepdims=True) * (1.0 / STYLE_DIM)
    x = x * jax.lax.rsqrt(ms + 1e-8)

    # 3x EqualLinear (scale/transpose already folded into w_ref) + leaky_relu(0.01).
    for l in range(N_MLP):  # short fixed trip count -> unrolled
        y = jnp.dot(x.astype(w_ref.dtype), w_ref[l],
                    preferred_element_type=jnp.float32)
        x = jnp.where(y > 0, y, LRELU_SLOPE * y)

    o_ref[...] = x.astype(o_ref.dtype)


def fc_forward(x, weights, *, tb=None, matmul_dtype=jnp.float32):
    """x: (B, STYLE_DIM) float32; weights: list of 3 arrays of shape (STYLE_DIM, STYLE_DIM)."""
    b, d = x.shape
    assert d == STYLE_DIM and len(weights) == N_MLP

    dp = _round_up(d, LANE)  # 128: lane-dense feature dim

    # Fold EqualLinear scale + transpose once (one-time XLA op) and stack + pad: (3, dp, dp).
    w_t = jnp.stack([(w.astype(jnp.float32) * EQL_SCALE).T for w in weights])
    w_t = jnp.pad(w_t, ((0, 0), (0, dp - d), (0, dp - d))).astype(matmul_dtype)

    # Sublane-aligned batch tile; cap so double-buffered x/out tiles stay tiny even on v7x.
    if tb is None:
        tb = min(_round_up(b, 8), 512)
    bp = _round_up(b, tb)
    x_p = jnp.pad(x, ((0, bp - b), (0, dp - d)))

    n_tiles = bp // tb
    flops = 2 * bp * dp * dp * N_MLP
    bytes_accessed = 4 * (bp * dp + N_MLP * dp * dp + bp * dp)

    out = pl.pallas_call(
        fc_kernel,
        out_shape=jax.ShapeDtypeStruct((bp, dp), x.dtype),
        grid=(n_tiles,),
        in_specs=[
            pl.BlockSpec((tb, dp), lambda i: (i, 0)),            # x: streamed per batch tile
            pl.BlockSpec((N_MLP, dp, dp), lambda i: (0, 0, 0)),  # weights: VMEM-resident
        ],
        out_specs=pl.BlockSpec((tb, dp), lambda i: (i, 0)),
        compiler_params=pltpu.CompilerParams(
            dimension_semantics=("parallel",)),
        cost_estimate=pl.CostEstimate(
            flops=flops, transcendentals=bp, bytes_accessed=bytes_accessed),
    )(x_p, w_t)

    return out[:b, :d]


def reference_forward(x, weights):
    x = x * jax.lax.rsqrt(jnp.mean(x * x, axis=1, keepdims=True) + 1e-8)
    for w in weights:
        y = x @ (w * EQL_SCALE).T
        x = jnp.where(y > 0, y, LRELU_SLOPE * y)
    return x


if __name__ == "__main__":
    key = jax.random.PRNGKey(0)
    k_x, k_w = jax.random.split(key)

    batch = 8
    x = jax.random.normal(k_x, (batch, STYLE_DIM), dtype=jnp.float32)

    # EqualLinear __init__: weight = randn(out_dim, in_dim) / lr_mul
    w_keys = jax.random.split(k_w, N_MLP)
    weights = [
        jax.random.normal(k, (STYLE_DIM, STYLE_DIM), dtype=jnp.float32) / LR_MLP
        for k in w_keys
    ]

    out = fc_forward(x, weights)
    out = jax.block_until_ready(out)

    ref = reference_forward(x, weights)
    assert out.shape == (batch, STYLE_DIM)
    assert jnp.allclose(out, ref, atol=1e-5, rtol=1e-5), "mismatch vs reference"

    print("KERNEL_OK")
</pallas_src>

<mosaic_0001>
module attributes {stable_mosaic.version = 11 : i64} {
  func.func @fc_kernel(%arg0: i32, %arg1: memref<8x128xf32, #tpu.memory_space<vmem>>, %arg2: memref<3x128x128xf32, #tpu.memory_space<vmem>>, %arg3: memref<8x128xf32, #tpu.memory_space<vmem>>) attributes {dimension_semantics = [#tpu.dimension_semantics<parallel>], iteration_bounds = array<i64: 1>, scalar_prefetch = 0 : i64, scratch_operands = 0 : i64, tpu.core_type = #tpu.core_type<tc>, window_params = [{transform_indices = @transform_0, window_bounds = array<i64: 8, 128>}, {pipeline_mode = #tpu.pipeline_mode<synchronous>, transform_indices = @transform_1, window_bounds = array<i64: 3, 128, 128>}, {transform_indices = @transform_2, window_bounds = array<i64: 8, 128>}]} {
    %c0 = arith.constant 0 : index
    %c0_0 = arith.constant 0 : index
    %0 = vector.load %arg1[%c0, %c0_0] : memref<8x128xf32, #tpu.memory_space<vmem>>, vector<8x128xf32>
    %1 = arith.mulf %0, %0 : vector<8x128xf32>
    %cst = arith.constant dense<0.000000e+00> : vector<8xf32>
    %2 = vector.multi_reduction <add>, %1, %cst [1] : vector<8x128xf32> to vector<8xf32>
    %3 = vector.shape_cast %2 : vector<8xf32> to vector<8x1xf32>
    %cst_1 = arith.constant 0.0434782617 : f32
    %4 = vector.broadcast %cst_1 : f32 to vector<8x1xf32>
    %5 = arith.mulf %3, %4 : vector<8x1xf32>
    %cst_2 = arith.constant 9.99999993E-9 : f32
    %6 = vector.broadcast %cst_2 : f32 to vector<8x1xf32>
    %7 = arith.addf %5, %6 : vector<8x1xf32>
    %8 = math.rsqrt %7 : vector<8x1xf32>
    %9 = vector.broadcast %8 : vector<8x1xf32> to vector<8x128xf32>
    %10 = arith.mulf %0, %9 : vector<8x128xf32>
    %c0_3 = arith.constant 0 : index
    %c0_4 = arith.constant 0 : index
    %c0_5 = arith.constant 0 : index
    %11 = vector.load %arg2[%c0_3, %c0_4, %c0_5] : memref<3x128x128xf32, #tpu.memory_space<vmem>>, vector<1x128x128xf32>
    %12 = vector.shape_cast %11 : vector<1x128x128xf32> to vector<128x128xf32>
    %cst_6 = arith.constant dense<0.000000e+00> : vector<8x128xf32>
    %13 = tpu.matmul %10, %12, %cst_6 {dimension_numbers = #tpu.dot_dimension_numbers<[1], [0], [0], [1], [0, 0, 1, 1], [], []>} : vector<8x128xf32>, vector<128x128xf32>, vector<8x128xf32> -> vector<8x128xf32>
    %cst_7 = arith.constant 0.000000e+00 : f32
    %14 = vector.broadcast %cst_7 : f32 to vector<8x128xf32>
    %15 = arith.cmpf ogt, %13, %14 : vector<8x128xf32>
    %cst_8 = arith.constant 0.00999999977 : f32
    %16 = vector.broadcast %cst_8 : f32 to vector<8x128xf32>
    %17 = arith.mulf %16, %13 : vector<8x128xf32>
    %18 = arith.select %15, %13, %17 : vector<8x128xi1>, vector<8x128xf32>
    %c1 = arith.constant 1 : index
    %c0_9 = arith.constant 0 : index
    %c0_10 = arith.constant 0 : index
    %19 = vector.load %arg2[%c1, %c0_9, %c0_10] : memref<3x128x128xf32, #tpu.memory_space<vmem>>, vector<1x128x128xf32>
    %20 = vector.shape_cast %19 : vector<1x128x128xf32> to vector<128x128xf32>
    %cst_11 = arith.constant dense<0.000000e+00> : vector<8x128xf32>
    %21 = tpu.matmul %18, %20, %cst_11 {dimension_numbers = #tpu.dot_dimension_numbers<[1], [0], [0], [1], [0, 0, 1, 1], [], []>} : vector<8x128xf32>, vector<128x128xf32>, vector<8x128xf32> -> vector<8x128xf32>
    %cst_12 = arith.constant 0.000000e+00 : f32
    %22 = vector.broadcast %cst_12 : f32 to vector<8x128xf32>
    %23 = arith.cmpf ogt, %21, %22 : vector<8x128xf32>
    %cst_13 = arith.constant 0.00999999977 : f32
    %24 = vector.broadcast %cst_13 : f32 to vector<8x128xf32>
    %25 = arith.mulf %24, %21 : vector<8x128xf32>
    %26 = arith.select %23, %21, %25 : vector<8x128xi1>, vector<8x128xf32>
    %c2 = arith.constant 2 : index
    %c0_14 = arith.constant 0 : index
    %c0_15 = arith.constant 0 : index
    %27 = vector.load %arg2[%c2, %c0_14, %c0_15] : memref<3x128x128xf32, #tpu.memory_space<vmem>>, vector<1x128x128xf32>
    %28 = vector.shape_cast %27 : vector<1x128x128xf32> to vector<128x128xf32>
    %cst_16 = arith.constant dense<0.000000e+00> : vector<8x128xf32>
    %29 = tpu.matmul %26, %28, %cst_16 {dimension_numbers = #tpu.dot_dimension_numbers<[1], [0], [0], [1], [0, 0, 1, 1], [], []>} : vector<8x128xf32>, vector<128x128xf32>, vector<8x128xf32> -> vector<8x128xf32>
    %cst_17 = arith.constant 0.000000e+00 : f32
    %30 = vector.broadcast %cst_17 : f32 to vector<8x128xf32>
    %31 = arith.cmpf ogt, %29, %30 : vector<8x128xf32>
    %cst_18 = arith.constant 0.00999999977 : f32
    %32 = vector.broadcast %cst_18 : f32 to vector<8x128xf32>
    %33 = arith.mulf %32, %29 : vector<8x128xf32>
    %34 = arith.select %31, %29, %33 : vector<8x128xi1>, vector<8x128xf32>
    %c0_19 = arith.constant 0 : index
    %c0_20 = arith.constant 0 : index
    %35 = vector.load %arg3[%c0_19, %c0_20] : memref<8x128xf32, #tpu.memory_space<vmem>>, vector<8x128xf32>
    tpu.vector_store %arg3[%c0_19, %c0_20], %34 {strides = array<i32>} : memref<8x128xf32, #tpu.memory_space<vmem>>, vector<8x128xf32>,
    return
  }
  func.func @transform_0(%arg0: i32) -> (i32, i32) {
    %c0_i32 = arith.constant 0 : i32
    %c0_i32_0 = arith.constant 0 : i32
    return %arg0, %c0_i32 : i32, i32
  }
  func.func @transform_1(%arg0: i32) -> (i32, i32, i32) {
    %c0_i32 = arith.constant 0 : i32
    %c0_i32_0 = arith.constant 0 : i32
    %c0_i32_1 = arith.constant 0 : i32
    %c0_i32_2 = arith.constant 0 : i32
    return %c0_i32, %c0_i32_0, %c0_i32_1 : i32, i32, i32
  }
  func.func @transform_2(%arg0: i32) -> (i32, i32) {
    %c0_i32 = arith.constant 0 : i32
    %c0_i32_0 = arith.constant 0 : i32
    return %arg0, %c0_i32 : i32, i32
  }
}

</mosaic_0001>

<llo_original>
// kernel: tpu_custom_call.1
$region0: #{tpu_custom_call.1}
  #allocation0 [shape = 'u32[]', space=smem, size = 0x4, offset = 0x4, fixed_abs, tag = 'smem constant byte address 0x4 - core index']
  #allocation1 [shape = 'u32[144,128]{1,0:T(1,128)}', space=vmem, size = 0x12000, scoped, tag = 'internal scratch']
  %s0 = inlined_call_operand.hbm [shape: f32[8,128], index: 0, kind: input, shape index: {}]
  %s1 = inlined_call_operand.hbm [shape: f32[3,128,128], index: 1, kind: input, shape index: {}]
  %s2 = inlined_call_operand.hbm [shape: f32[8,128], index: 2, kind: output, shape index: {}]
  %s3 = sld [smem:[#allocation0]]
  $region26: #{tpu_custom_call.1} parent=0
    _
  %s5 = ssub.s32 1, %s3
  %s6 = scalar_select 0, %s5, %s3
  $region1: #{tpu_custom_call.1} parent=0
    #allocation2 [shape = 'u8[4096]{0}', space=vmem, size = 0x1000, scoped, tag = 'input window, operand 0, single buffered']
    #allocation3 [shape = 's32[1]{0}', space=sflag, size = 0x4, scoped, tag = 'scoped memory for tpu_custom_call.1']
    #allocation4 [shape = 's32[1]{0}', space=sflag, size = 0x4, scoped, tag = 'scoped memory for tpu_custom_call.1']
    #allocation5 [shape = 'u8[196608]{0}', space=vmem, size = 0x30000, scoped, tag = 'input window, operand 1, single buffered']
    #allocation6 [shape = 's32[1]{0}', space=sflag, size = 0x4, scoped, tag = 'scoped memory for tpu_custom_call.1']
    #allocation7 [shape = 'u8[4096]{0}', space=vmem, size = 0x1000, scoped, tag = 'output window, operand 0, single buffered']
    %7 = vsyncpa [#allocation3], 0
    %8 = vsyncpa [#allocation6], 0
    %9 = vsyncpa [#allocation4], 0
    // Predicated region
    $region2: #{tpu_custom_call.1} parent=1 // pred_check
      _
    $region3: #{tpu_custom_call.1} parent=1 // pred_check_branch
      %11 = sbr.rel (0) target = $region5
    $region4: #{tpu_custom_call.1} parent=1 // pred_region
      %s13 = ssub.s32 128, 128
      %14 = vsyncadd [#allocation3], %s13
      %s16 = sshll.u32 [#allocation2], 4
      %s17 = int_to_ptr.vmem [resolvable:$true] %s16
      %19 = dma.hbm_to_vmem [thread:$0]  %s0, 128, %s17, [#allocation3]
    $region5: #{tpu_custom_call.1} parent=1 // pred_fallthru
      _
    // Predicated region
    $region6: #{tpu_custom_call.1} parent=1 // pred_check
      _
    $region7: #{tpu_custom_call.1} parent=1 // pred_check_branch
      %21 = sbr.rel (0) target = $region9
    $region8: #{tpu_custom_call.1} parent=1 // pred_region
      %s23 = ssub.s32 6144, 6144
      %24 = vsyncadd [#allocation6], %s23
      %s25 = sshll.u32 [#allocation5], 4
      %s26 = int_to_ptr.vmem [resolvable:$true] %s25
      %31 = dma.hbm_to_vmem [thread:$0]  %s1, 6144, %s26, [#allocation6], 128, 128, 8
    $region9: #{tpu_custom_call.1} parent=1 // pred_fallthru
      _
    // Predicated region
    $region10: #{tpu_custom_call.1} parent=1 // pred_check
      _
    $region11: #{tpu_custom_call.1} parent=1 // pred_check_branch
      %33 = sbr.rel (0) target = $region13
    $region12: #{tpu_custom_call.1} parent=1 // pred_region
      %34 = dma.done [#allocation3], 128
    $region13: #{tpu_custom_call.1} parent=1 // pred_fallthru
      _
    // Predicated region
    $region14: #{tpu_custom_call.1} parent=1 // pred_check
      _
    $region15: #{tpu_custom_call.1} parent=1 // pred_check_branch
      %36 = sbr.rel (0) target = $region17
    $region16: #{tpu_custom_call.1} parent=1 // pred_region
      %37 = dma.done [#allocation6], 6144
    $region17: #{tpu_custom_call.1} parent=1 // pred_fallthru
      _
    %v38 = vld [vmem:[#allocation2] sm:$0xff]
    %v39 = vmul.f32 %v38, %v38
    %40 = vadd.xlane.f32.xlu0 %v39
    %v41 = vpop.xlane.xlu0 %40
    %v42 = vmul.f32 %v41, 0.04347826
    %v43 = vadd.f32 %v42, 1e-08
    %v44 = vrsqrt.pop %v43
    %v45 = vmul.f32 %v38, %v44
    %v46 = vld [vmem:[#allocation5] sm:$0xff]
    %v47 = vld [vmem:[#allocation5 + $0x8] sm:$0xff]
    %v48 = vld [vmem:[#allocation5 + $0x10] sm:$0xff]
    %v49 = vld [vmem:[#allocation5 + $0x18] sm:$0xff]
    %v50 = vld [vmem:[#allocation5 + $0x20] sm:$0xff]
    %v51 = vld [vmem:[#allocation5 + $0x28] sm:$0xff]
    %v52 = vld [vmem:[#allocation5 + $0x30] sm:$0xff]
    %v53 = vld [vmem:[#allocation5 + $0x38] sm:$0xff]
    %v54 = vld [vmem:[#allocation5 + $0x40] sm:$0xff]
    %v55 = vld [vmem:[#allocation5 + $0x48] sm:$0xff]
    %v56 = vld [vmem:[#allocation5 + $0x50] sm:$0xff]
    %v57 = vld [vmem:[#allocation5 + $0x58] sm:$0xff]
    %v58 = vld [vmem:[#allocation5 + $0x60] sm:$0xff]
    %v59 = vld [vmem:[#allocation5 + $0x68] sm:$0xff]
    %v60 = vld [vmem:[#allocation5 + $0x70] sm:$0xff]
    %v61 = vld [vmem:[#allocation5 + $0x78] sm:$0xff]
    %62 = vmatprep.subr.mxu0 0.0
    %63 = vmatpush1.msra.mxu0 %v46
    %64 = vmatprep.subr.mxu0 0.0
    %65 = vmatpush1.msra.mxu0 %v47
    %66 = vmatprep.subr.mxu0 0.0
    %67 = vmatpush1.msra.mxu0 %v48
    %68 = vmatprep.subr.mxu0 0.0
    %69 = vmatpush1.msra.mxu0 %v49
    %70 = vmatprep.subr.mxu0 0.0
    %71 = vmatpush1.msra.mxu0 %v50
    %72 = vmatprep.subr.mxu0 0.0
    %73 = vmatpush1.msra.mxu0 %v51
    %74 = vmatprep.subr.mxu0 0.0
    %75 = vmatpush1.msra.mxu0 %v52
    %76 = vmatprep.subr.mxu0 0.0
    %77 = vmatpush1.msra.mxu0 %v53
    %78 = vmatprep.subr.mxu0 0.0
    %79 = vmatpush1.msra.mxu0 %v54
    %80 = vmatprep.subr.mxu0 0.0
    %81 = vmatpush1.msra.mxu0 %v55
    %82 = vmatprep.subr.mxu0 0.0
    %83 = vmatpush1.msra.mxu0 %v56
    %84 = vmatprep.subr.mxu0 0.0
    %85 = vmatpush1.msra.mxu0 %v57
    %86 = vmatprep.subr.mxu0 0.0
    %87 = vmatpush1.msra.mxu0 %v58
    %88 = vmatprep.subr.mxu0 0.0
    %89 = vmatpush1.msra.mxu0 %v59
    %90 = vmatprep.subr.mxu0 0.0
    %91 = vmatpush1.msra.mxu0 %v60
    %92 = vmatprep.subr.mxu0 0.0
    %93 = vmatpush1.msra.mxu0 %v61
    %94 = vmatprep.subr.mxu0 0.0
    %95 = vmatpush1.msra.mxu0 0.0
    %96 = vmatprep.subr.mxu0 0.0
    %97 = vmatpush1.msra.mxu0 0.0
    %98 = vmatprep.subr.mxu0 0.0
    %99 = vmatpush1.msra.mxu0 0.0
    %100 = vmatprep.subr.mxu0 0.0
    %101 = vmatpush1.msra.mxu0 0.0
    %102 = vmatprep.subr.mxu0 0.0
    %103 = vmatpush1.msra.mxu0 0.0
    %104 = vmatprep.subr.mxu0 0.0
    %105 = vmatpush1.msra.mxu0 0.0
    %106 = vmatprep.subr.mxu0 0.0
    %107 = vmatpush1.msra.mxu0 0.0
    %108 = vmatprep.subr.mxu0 0.0
    %109 = vmatpush1.msra.mxu0 0.0
    %110 = vmatprep.subr.mxu0 0.0
    %111 = vmatpush1.msra.mxu0 0.0
    %112 = vmatprep.subr.mxu0 0.0
    %113 = vmatpush1.msra.mxu0 0.0
    %114 = vmatprep.subr.mxu0 0.0
    %115 = vmatpush1.msra.mxu0 0.0
    %116 = vmatprep.subr.mxu0 0.0
    %117 = vmatpush1.msra.mxu0 0.0
    %118 = vmatprep.subr.mxu0 0.0
    %119 = vmatpush1.msra.mxu0 0.0
    %120 = vmatprep.subr.mxu0 0.0
    %121 = vmatpush1.msra.mxu0 0.0
    %122 = vmatprep.subr.mxu0 0.0
    %123 = vmatpush1.msra.mxu0 0.0
    %124 = vmatprep.subr.mxu0 0.0
    %125 = vmatpush1.msra.mxu0 0.0
    %126 = vmatprep.mubr.f32.mxu0 0.0
    %127 = vmatmul.mubr.f32.gmra.mrb[0].mxu0 %v45
    %v128 = vpop.f32.mrb[0].mxu0
    %v129 = vadd.f32 0.0, %v128
    %v130 = vpop.f32.mrb[0].mxu0
    %131 = vdwg.mxu0
    %vm132 = vcmp.gt.f32.partialorder %v129, 0.0
    %v133 = vmul.f32 %v129, 0.01
    %v134 = vsel %vm132, %v129, %v133
    %s135 = scalar_lea.vmem [#allocation5], 128
    %v136 = vld [vmem:[%s135] sm:$0xff]
    %v137 = vld [vmem:[%s135 + $0x8] sm:$0xff]
    %v138 = vld [vmem:[%s135 + $0x10] sm:$0xff]
    %v139 = vld [vmem:[%s135 + $0x18] sm:$0xff]
    %v140 = vld [vmem:[%s135 + $0x20] sm:$0xff]
    %v141 = vld [vmem:[%s135 + $0x28] sm:$0xff]
    %v142 = vld [vmem:[%s135 + $0x30] sm:$0xff]
    %v143 = vld [vmem:[%s135 + $0x38] sm:$0xff]
    %v144 = vld [vmem:[%s135 + $0x40] sm:$0xff]
    %v145 = vld [vmem:[%s135 + $0x48] sm:$0xff]
    %v146 = vld [vmem:[%s135 + $0x50] sm:$0xff]
    %v147 = vld [vmem:[%s135 + $0x58] sm:$0xff]
    %v148 = vld [vmem:[%s135 + $0x60] sm:$0xff]
    %v149 = vld [vmem:[%s135 + $0x68] sm:$0xff]
    %v150 = vld [vmem:[%s135 + $0x70] sm:$0xff]
    %v151 = vld [vmem:[%s135 + $0x78] sm:$0xff]
    %152 = vmatprep.subr.mxu0 0.0
    %153 = vmatpush1.msra.mxu0 %v136
    %154 = vmatprep.subr.mxu0 0.0
    %155 = vmatpush1.msra.mxu0 %v137
    %156 = vmatprep.subr.mxu0 0.0
    %157 = vmatpush1.msra.mxu0 %v138
    %158 = vmatprep.subr.mxu0 0.0
    %159 = vmatpush1.msra.mxu0 %v139
    %160 = vmatprep.subr.mxu0 0.0
    %161 = vmatpush1.msra.mxu0 %v140
    %162 = vmatprep.subr.mxu0 0.0
    %163 = vmatpush1.msra.mxu0 %v141
    %164 = vmatprep.subr.mxu0 0.0
    %165 = vmatpush1.msra.mxu0 %v142
    %166 = vmatprep.subr.mxu0 0.0
    %167 = vmatpush1.msra.mxu0 %v143
    %168 = vmatprep.subr.mxu0 0.0
    %169 = vmatpush1.msra.mxu0 %v144
    %170 = vmatprep.subr.mxu0 0.0
    %171 = vmatpush1.msra.mxu0 %v145
    %172 = vmatprep.subr.mxu0 0.0
    %173 = vmatpush1.msra.mxu0 %v146
    %174 = vmatprep.subr.mxu0 0.0
    %175 = vmatpush1.msra.mxu0 %v147
    %176 = vmatprep.subr.mxu0 0.0
    %177 = vmatpush1.msra.mxu0 %v148
    %178 = vmatprep.subr.mxu0 0.0
    %179 = vmatpush1.msra.mxu0 %v149
    %180 = vmatprep.subr.mxu0 0.0
    %181 = vmatpush1.msra.mxu0 %v150
    %182 = vmatprep.subr.mxu0 0.0
    %183 = vmatpush1.msra.mxu0 %v151
    %184 = vmatprep.subr.mxu0 0.0
    %185 = vmatpush1.msra.mxu0 0.0
    %186 = vmatprep.subr.mxu0 0.0
    %187 = vmatpush1.msra.mxu0 0.0
    %188 = vmatprep.subr.mxu0 0.0
    %189 = vmatpush1.msra.mxu0 0.0
    %190 = vmatprep.subr.mxu0 0.0
    %191 = vmatpush1.msra.mxu0 0.0
    %192 = vmatprep.subr.mxu0 0.0
    %193 = vmatpush1.msra.mxu0 0.0
    %194 = vmatprep.subr.mxu0 0.0
    %195 = vmatpush1.msra.mxu0 0.0
    %196 = vmatprep.subr.mxu0 0.0
    %197 = vmatpush1.msra.mxu0 0.0
    %198 = vmatprep.subr.mxu0 0.0
    %199 = vmatpush1.msra.mxu0 0.0
    %200 = vmatprep.subr.mxu0 0.0
    %201 = vmatpush1.msra.mxu0 0.0
    %202 = vmatprep.subr.mxu0 0.0
    %203 = vmatpush1.msra.mxu0 0.0
    %204 = vmatprep.subr.mxu0 0.0
    %205 = vmatpush1.msra.mxu0 0.0
    %206 = vmatprep.subr.mxu0 0.0
    %207 = vmatpush1.msra.mxu0 0.0
    %208 = vmatprep.subr.mxu0 0.0
    %209 = vmatpush1.msra.mxu0 0.0
    %210 = vmatprep.subr.mxu0 0.0
    %211 = vmatpush1.msra.mxu0 0.0
    %212 = vmatprep.subr.mxu0 0.0
    %213 = vmatpush1.msra.mxu0 0.0
    %214 = vmatprep.subr.mxu0 0.0
    %215 = vmatpush1.msra.mxu0 0.0
    %216 = vmatprep.mubr.f32.mxu0 0.0
    %217 = vmatmul.mubr.f32.gmra.mrb[0].mxu0 %v134
    %v218 = vpop.f32.mrb[0].mxu0
    %v219 = vadd.f32 0.0, %v218
    %v220 = vpop.f32.mrb[0].mxu0
    %221 = vdwg.mxu0
    %vm222 = vcmp.gt.f32.partialorder %v219, 0.0
    %v223 = vmul.f32 %v219, 0.01
    %v224 = vsel %vm222, %v219, %v223
    %s225 = scalar_lea.vmem [#allocation5], 256
    %v226 = vld [vmem:[%s225] sm:$0xff]
    %v227 = vld [vmem:[%s225 + $0x8] sm:$0xff]
    %v228 = vld [vmem:[%s225 + $0x10] sm:$0xff]
    %v229 = vld [vmem:[%s225 + $0x18] sm:$0xff]
    %v230 = vld [vmem:[%s225 + $0x20] sm:$0xff]
    %v231 = vld [vmem:[%s225 + $0x28] sm:$0xff]
    %v232 = vld [vmem:[%s225 + $0x30] sm:$0xff]
    %v233 = vld [vmem:[%s225 + $0x38] sm:$0xff]
    %v234 = vld [vmem:[%s225 + $0x40] sm:$0xff]
    %v235 = vld [vmem:[%s225 + $0x48] sm:$0xff]
    %v236 = vld [vmem:[%s225 + $0x50] sm:$0xff]
    %v237 = vld [vmem:[%s225 + $0x58] sm:$0xff]
    %v238 = vld [vmem:[%s225 + $0x60] sm:$0xff]
    %v239 = vld [vmem:[%s225 + $0x68] sm:$0xff]
    %v240 = vld [vmem:[%s225 + $0x70] sm:$0xff]
    %v241 = vld [vmem:[%s225 + $0x78] sm:$0xff]
    %242 = vmatprep.subr.mxu0 0.0
    %243 = vmatpush1.msra.mxu0 %v226
    %244 = vmatprep.subr.mxu0 0.0
    %245 = vmatpush1.msra.mxu0 %v227
    %246 = vmatprep.subr.mxu0 0.0
    %247 = vmatpush1.msra.mxu0 %v228
    %248 = vmatprep.subr.mxu0 0.0
    %249 = vmatpush1.msra.mxu0 %v229
    %250 = vmatprep.subr.mxu0 0.0
    %251 = vmatpush1.msra.mxu0 %v230
    %252 = vmatprep.subr.mxu0 0.0
    %253 = vmatpush1.msra.mxu0 %v231
    %254 = vmatprep.subr.mxu0 0.0
    %255 = vmatpush1.msra.mxu0 %v232
    %256 = vmatprep.subr.mxu0 0.0
    %257 = vmatpush1.msra.mxu0 %v233
    %258 = vmatprep.subr.mxu0 0.0
    %259 = vmatpush1.msra.mxu0 %v234
    %260 = vmatprep.subr.mxu0 0.0
    %261 = vmatpush1.msra.mxu0 %v235
    %262 = vmatprep.subr.mxu0 0.0
    %263 = vmatpush1.msra.mxu0 %v236
    %264 = vmatprep.subr.mxu0 0.0
    %265 = vmatpush1.msra.mxu0 %v237
    %266 = vmatprep.subr.mxu0 0.0
    %267 = vmatpush1.msra.mxu0 %v238
    %268 = vmatprep.subr.mxu0 0.0
    %269 = vmatpush1.msra.mxu0 %v239
    %270 = vmatprep.subr.mxu0 0.0
    %271 = vmatpush1.msra.mxu0 %v240
    %272 = vmatprep.subr.mxu0 0.0
    %273 = vmatpush1.msra.mxu0 %v241
    %274 = vmatprep.subr.mxu0 0.0
    %275 = vmatpush1.msra.mxu0 0.0
    %276 = vmatprep.subr.mxu0 0.0
    %277 = vmatpush1.msra.mxu0 0.0
    %278 = vmatprep.subr.mxu0 0.0
    %279 = vmatpush1.msra.mxu0 0.0
    %280 = vmatprep.subr.mxu0 0.0
    %281 = vmatpush1.msra.mxu0 0.0
    %282 = vmatprep.subr.mxu0 0.0
    %283 = vmatpush1.msra.mxu0 0.0
    %284 = vmatprep.subr.mxu0 0.0
    %285 = vmatpush1.msra.mxu0 0.0
    %286 = vmatprep.subr.mxu0 0.0
    %287 = vmatpush1.msra.mxu0 0.0
    %288 = vmatprep.subr.mxu0 0.0
    %289 = vmatpush1.msra.mxu0 0.0
    %290 = vmatprep.subr.mxu0 0.0
    %291 = vmatpush1.msra.mxu0 0.0
    %292 = vmatprep.subr.mxu0 0.0
    %293 = vmatpush1.msra.mxu0 0.0
    %294 = vmatprep.subr.mxu0 0.0
    %295 = vmatpush1.msra.mxu0 0.0
    %296 = vmatprep.subr.mxu0 0.0
    %297 = vmatpush1.msra.mxu0 0.0
    %298 = vmatprep.subr.mxu0 0.0
    %299 = vmatpush1.msra.mxu0 0.0
    %300 = vmatprep.subr.mxu0 0.0
    %301 = vmatpush1.msra.mxu0 0.0
    %302 = vmatprep.subr.mxu0 0.0
    %303 = vmatpush1.msra.mxu0 0.0
    %304 = vmatprep.subr.mxu0 0.0
    %305 = vmatpush1.msra.mxu0 0.0
    %306 = vmatprep.mubr.f32.mxu0 0.0
    %307 = vmatmul.mubr.f32.gmra.mrb[0].mxu0 %v224
    %v308 = vpop.f32.mrb[0].mxu0
    %v309 = vadd.f32 0.0, %v308
    %v310 = vpop.f32.mrb[0].mxu0
    %311 = vdwg.mxu0
    %vm312 = vcmp.gt.f32.partialorder %v309, 0.0
    %v313 = vmul.f32 %v309, 0.01
    %v314 = vsel %vm312, %v309, %v313
    %315 = vst [vmem:[#allocation7] sm:$0xff] %v314
    // Predicated region
    $region18: #{tpu_custom_call.1} parent=1 // pred_check
      _
    $region19: #{tpu_custom_call.1} parent=1 // pred_check_branch
      %317 = sbr.rel (0) target = $region21
    $region20: #{tpu_custom_call.1} parent=1 // pred_region
      %s319 = ssub.s32 128, 128
      %320 = vsyncadd [#allocation4], %s319
      %s322 = sshll.u32 [#allocation7], 4
      %s323 = int_to_ptr.vmem [resolvable:$true] %s322
      %325 = dma.vmem_to_hbm [thread:$0]  %s323, 128, %s2, [#allocation4]
    $region21: #{tpu_custom_call.1} parent=1 // pred_fallthru
      _
    // Predicated region
    $region22: #{tpu_custom_call.1} parent=1 // pred_check
      _
    $region23: #{tpu_custom_call.1} parent=1 // pred_check_branch
      %327 = sbr.rel (0) target = $region25
    $region24: #{tpu_custom_call.1} parent=1 // pred_region
      %328 = dma.done [#allocation4], 128
    $region25: #{tpu_custom_call.1} parent=1 // pred_fallthru
      _
    %329 = vsyncpa [#allocation3], 1
    %330 = vsyncpa [#allocation6], 1
    %331 = vsyncpa [#allocation4], 1

</llo_original>
